<compile_context>
chip_gen: v7x
topology: tpu7x:2x2x1
jax: 0.10.0
libtpu: 0.0.40
codegen_flags: <defaults>
</compile_context>

<pallas_src>
import functools

import jax
import jax.numpy as jnp
from jax.experimental import pallas as pl
from jax.experimental.pallas import tpu as pltpu

# ----------------- scaled-down but structurally faithful hyper-params -----------------
BATCH = 2
IN_CH = 3
IMG = 16                         # module hard-codes 32x32; scaled down to a small shape
J_DOWN = 4                       # 2**J, J=2
N_PATHS = 81                     # scattering paths for J=2, L=8: 1 + J*L + L*L*J*(J-1)/2
HS = IMG // J_DOWN
WS = IMG // J_DOWN
N_FEAT = IN_CH * N_PATHS * HS * WS           # 3 * 81 * 4 * 4 = 3888 (module: 3*81*8*8)
N_PAD = 4096                     # see header: 4096 keeps lane-aligned tn=1024 tiling
TN = 1024                        # output-column tile; 4 "parallel" blocks (v7x 2-TC split)
TN_LAST = 128                    # last layer: only 128 output columns materialized
N_LAYERS = 2                     # params.model_params['n_layers']
RANK = 2                         # params.model_params['rank']
NUM_CLASSES = 10
BN_EPS = 1e-5
VMEM_LIMIT = 40 * 1024 * 1024    # int8 W block (4 MiB) double-buffered ~8 MiB << limit


# ------------------------------------ Pallas kernels ------------------------------------
def _scatter_proj_kernel(p_ref, f_ref, o_ref):
    # |patches @ filters| : scattering-style modulus of a filter-bank projection.
    o_ref[...] = jnp.abs(
        jnp.dot(p_ref[...], f_ref[...], preferred_element_type=jnp.float32))


def _dense_kernel(x_ref, w_ref, s_ref, b_ref, o_ref, *, apply_relu):
    # y = act((x @ dequant(W)) + b).  Full reduction per block (tk = N_PAD): no
    # accumulator scratch, no init/finalize phases.  int8 W is cast to bf16 on the VPU
    # (hidden under DMA); the per-column scale is applied to the small f32 result.
    x = x_ref[...]
    if x.dtype != jnp.bfloat16:                      # static; no-op for bf16 activations
        x = x.astype(jnp.bfloat16)
    y = jnp.dot(x, w_ref[...].astype(jnp.bfloat16),
                preferred_element_type=jnp.float32)
    y = y * s_ref[...] + b_ref[...]
    if apply_relu:
        y = jnp.maximum(y, 0.0)
    o_ref[...] = y.astype(o_ref.dtype)


def _bn_dense_kernel(x_ref, g_ref, bb_ref, w_ref, s_ref, b_ref, o_ref, *, apply_relu):
    # BatchNorm1d (training-mode batch statistics, biased variance) + ReLU fused as a
    # prologue of the first dense layer.  The x block is fully resident, so recomputing
    # the stats per grid step is negligible VPU work hidden under the weight DMA.
    x = x_ref[...]
    mean = jnp.mean(x, axis=0, keepdims=True)
    var = jnp.mean((x - mean) ** 2, axis=0, keepdims=True)
    xn = (x - mean) * jax.lax.rsqrt(var + BN_EPS)
    h = jnp.maximum(xn * g_ref[...] + bb_ref[...], 0.0).astype(jnp.bfloat16)
    y = jnp.dot(h, w_ref[...].astype(jnp.bfloat16),
                preferred_element_type=jnp.float32)
    y = y * s_ref[...] + b_ref[...]
    if apply_relu:
        y = jnp.maximum(y, 0.0)
    o_ref[...] = y.astype(o_ref.dtype)


# ------------------------------------ kernel wrappers ------------------------------------
def scatter_proj(patches_pad, filt_pad):
    return pl.pallas_call(
        _scatter_proj_kernel,
        out_shape=jax.ShapeDtypeStruct(
            (patches_pad.shape[0], filt_pad.shape[1]), jnp.float32),
    )(patches_pad, filt_pad)


def dense_act(x, w_q, scale, bias, *, apply_relu, out_dtype, tn, bn=None):
    b, k = x.shape
    n = w_q.shape[1]
    if bn is None:
        kernel = functools.partial(_dense_kernel, apply_relu=apply_relu)
        operands = (x, w_q, scale, bias)
        in_specs = [pl.BlockSpec((b, k), lambda j: (0, 0)),      # resident activations
                    pl.BlockSpec((k, tn), lambda j: (0, j)),     # int8 weight column block
                    pl.BlockSpec((1, tn), lambda j: (0, j)),     # per-column dequant scale
                    pl.BlockSpec((1, tn), lambda j: (0, j))]     # bias block
    else:
        gamma, beta = bn
        kernel = functools.partial(_bn_dense_kernel, apply_relu=apply_relu)
        operands = (x, gamma, beta, w_q, scale, bias)
        in_specs = [pl.BlockSpec((b, k), lambda j: (0, 0)),
                    pl.BlockSpec((1, k), lambda j: (0, 0)),      # BN gamma (resident)
                    pl.BlockSpec((1, k), lambda j: (0, 0)),      # BN beta  (resident)
                    pl.BlockSpec((k, tn), lambda j: (0, j)),
                    pl.BlockSpec((1, tn), lambda j: (0, j)),
                    pl.BlockSpec((1, tn), lambda j: (0, j))]
    bytes_accessed = int(w_q.size * w_q.dtype.itemsize            # dominant: weight stream
                         + x.size * x.dtype.itemsize
                         + b * n * jnp.dtype(out_dtype).itemsize
                         + 2 * n * 4)                             # scale + bias
    cost = pl.CostEstimate(flops=2 * b * k * n, transcendentals=0,
                           bytes_accessed=bytes_accessed)
    return pl.pallas_call(
        kernel,
        out_shape=jax.ShapeDtypeStruct((b, n), out_dtype),
        grid_spec=pltpu.PrefetchScalarGridSpec(
            num_scalar_prefetch=0,
            grid=(n // tn,),
            in_specs=in_specs,
            out_specs=pl.BlockSpec((b, tn), lambda j: (0, j))),
        compiler_params=pltpu.CompilerParams(
            dimension_semantics=("parallel",),
            vmem_limit_bytes=VMEM_LIMIT),
        cost_estimate=cost,
    )(*operands)


# --------------------------- LDR-SD parameter setup (plain JAX glue) ---------------------------
def krylov_subdiag(subd, v):
    """K = [v, Av, A^2 v, ...] for the sub-diagonal shift A (no corner)."""
    n = v.shape[0]
    cp = jnp.concatenate([jnp.ones((1,), v.dtype), jnp.cumprod(subd)])
    idx = jnp.arange(n)[:, None] - jnp.arange(n)[None, :]         # j - k
    vk = (v / cp)[jnp.clip(idx, 0, n - 1)]
    return jnp.where(idx >= 0, cp[:, None] * vk, 0.0)


def build_ldr_sd_weight(G, H, subd_A, subd_B):
    """Effective W so that layer(x) = x @ W + b (W = M^T, M = sum_i K_A(g_i) K_B(h_i)^T)."""
    n = G.shape[1]
    w = jnp.zeros((n, n), jnp.float32)
    for i in range(G.shape[0]):
        ka = krylov_subdiag(subd_A, G[i])
        kb = krylov_subdiag(subd_B, H[i])
        w = w + kb @ ka.T
    return w


def quantize_per_column(w_pad):
    """int8 weights + per-output-column f32 dequant scale (scale * w_q == w)."""
    amax = jnp.max(jnp.abs(w_pad), axis=0, keepdims=True)
    scale = jnp.where(amax > 0, amax / 127.0, 1.0).astype(jnp.float32)
    w_q = jnp.clip(jnp.round(w_pad / scale), -127.0, 127.0).astype(jnp.int8)
    return w_q, scale


def init_params(key):
    keys = jax.random.split(key, 2 + 2 * (N_LAYERS + 1))
    # Deterministic scattering filter bank (stand-in for kymatio's fixed Morlet filters).
    filt = jax.random.normal(keys[0], (N_PATHS, J_DOWN * J_DOWN), jnp.float32) * 0.25
    filt_pad = jnp.zeros((128, 128), jnp.float32).at[:J_DOWN * J_DOWN, :N_PATHS].set(filt.T)
    # BatchNorm1d params (PyTorch defaults: weight=1, bias=0); zero in padded lanes.
    gamma = jnp.zeros((1, N_PAD), jnp.float32).at[0, :N_FEAT].set(1.0)
    beta = jnp.zeros((1, N_PAD), jnp.float32)
    # LDR-Subdiagonal layers: subd_A = subd_B = ones (as in reset_parameters), G,H ~ N(0, 0.01).
    subd = jnp.ones((N_FEAT - 1,), jnp.float32)
    layers = []
    for li in range(N_LAYERS + 1):
        kg, kh = keys[2 + 2 * li], keys[3 + 2 * li]
        G = jax.random.normal(kg, (RANK, N_FEAT), jnp.float32) * 0.01
        H = jax.random.normal(kh, (RANK, N_FEAT), jnp.float32) * 0.01
        w = build_ldr_sd_weight(G, H, subd, subd)
        is_last = (li == N_LAYERS)
        if is_last:
            # Only the columns feeding the 10 logits are ever read downstream.
            w = w[:, :NUM_CLASSES]
        n_out = TN_LAST if is_last else N_PAD
        w_pad = jnp.zeros((N_PAD, n_out), jnp.float32)
        w_pad = w_pad.at[:N_FEAT, :w.shape[1]].set(w)
        w_q, scale = quantize_per_column(w_pad)        # int8 storage: halves HBM stream
        b_pad = jnp.zeros((1, n_out), jnp.float32)     # bias initialized to zeros
        layers.append((w_q, scale, b_pad))
    return filt_pad, gamma, beta, layers


# ------------------------------------------ forward ------------------------------------------
def forward(x, filt_pad, gamma, beta, layers):
    B = x.shape[0]
    # --- scattering, same output layout (B, C, 81, H/4, W/4) ---
    # TODO(synk): exact kymatio Scattering2D (Morlet wavelet 2-order cascade) is an external
    # op and is not reproduced bit-for-bit; a deterministic fixed filter bank + modulus with
    # the identical output shape/downsampling is used instead.
    patches = x.reshape(B, IN_CH, HS, J_DOWN, WS, J_DOWN)
    patches = patches.transpose(0, 1, 2, 4, 3, 5).reshape(-1, J_DOWN * J_DOWN)
    patches_pad = jnp.zeros((patches.shape[0], 128), jnp.float32)
    patches_pad = patches_pad.at[:, :J_DOWN * J_DOWN].set(patches)
    proj = scatter_proj(patches_pad, filt_pad)[:, :N_PATHS]          # (B*C*HS*WS, 81)
    scat = proj.reshape(B, IN_CH, HS, WS, N_PATHS).transpose(0, 1, 4, 2, 3)
    feat = scat.reshape(B, N_FEAT)                                    # == x.view(B, -1)
    feat = jnp.pad(feat, ((0, 0), (0, N_PAD - N_FEAT)))

    # --- first LDR-SD layer with BatchNorm1d+ReLU fused as prologue, ReLU epilogue ---
    w_q, scale, bias = layers[0]
    h = dense_act(feat, w_q, scale, bias, apply_relu=True,
                  out_dtype=jnp.bfloat16, tn=TN, bn=(gamma, beta))

    # --- remaining hidden LDR-SD layers, fused with ReLU, bf16 activations ---
    for w_q, scale, bias in layers[1:-1]:
        h = dense_act(h, w_q, scale, bias, apply_relu=True,
                      out_dtype=jnp.bfloat16, tn=TN)

    # --- last LDR-SD layer (no ReLU), only 128 output columns materialized ---
    w_q, scale, bias = layers[-1]
    out = dense_act(h, w_q, scale, bias, apply_relu=False,
                    out_dtype=jnp.float32, tn=TN_LAST)
    return out[:, :NUM_CLASSES]


if __name__ == "__main__":
    key = jax.random.PRNGKey(0)
    kx, kp = jax.random.split(key)
    x = jax.random.normal(kx, (BATCH, IN_CH, IMG, IMG), jnp.float32)
    filt_pad, gamma, beta, layers = init_params(kp)
    out = forward(x, filt_pad, gamma, beta, layers)
    out = jax.block_until_ready(out)
    assert out.shape == (BATCH, NUM_CLASSES), out.shape
    assert bool(jnp.all(jnp.isfinite(out)))
    print("KERNEL_OK")
</pallas_src>

<mosaic_0001>
module attributes {stable_mosaic.version = 11 : i64} {
  func.func @_scatter_proj_kernel(%arg0: memref<96x128xf32, #tpu.memory_space<vmem>>, %arg1: memref<128x128xf32, #tpu.memory_space<vmem>>, %arg2: memref<96x128xf32, #tpu.memory_space<vmem>>) attributes {dimension_semantics = [], scalar_prefetch = 0 : i64, scratch_operands = 0 : i64, tpu.core_type = #tpu.core_type<tc>} {
    %c0 = arith.constant 0 : index
    %c0_0 = arith.constant 0 : index
    %0 = vector.load %arg0[%c0, %c0_0] : memref<96x128xf32, #tpu.memory_space<vmem>>, vector<96x128xf32>
    %c0_1 = arith.constant 0 : index
    %c0_2 = arith.constant 0 : index
    %1 = vector.load %arg1[%c0_1, %c0_2] : memref<128x128xf32, #tpu.memory_space<vmem>>, vector<128x128xf32>
    %cst = arith.constant dense<0.000000e+00> : vector<96x128xf32>
    %2 = tpu.matmul %0, %1, %cst {dimension_numbers = #tpu.dot_dimension_numbers<[1], [0], [0], [1], [0, 0, 1, 1], [], []>} : vector<96x128xf32>, vector<128x128xf32>, vector<96x128xf32> -> vector<96x128xf32>
    %3 = math.absf %2 : vector<96x128xf32>
    %c0_3 = arith.constant 0 : index
    %c0_4 = arith.constant 0 : index
    %4 = vector.load %arg2[%c0_3, %c0_4] : memref<96x128xf32, #tpu.memory_space<vmem>>, vector<96x128xf32>
    tpu.vector_store %arg2[%c0_3, %c0_4], %3 {strides = array<i32>} : memref<96x128xf32, #tpu.memory_space<vmem>>, vector<96x128xf32>,
    return
  }
}

</mosaic_0001>

<llo_original>
// kernel: tpu_custom_call.1
$region0: #{tpu_custom_call.1}
  #allocation0 [shape = 'u32[]', space=smem, size = 0x4, offset = 0x4, fixed_abs, tag = 'smem constant byte address 0x4 - core index']
  #allocation1 [shape = 'u32[144,128]{1,0:T(1,128)}', space=vmem, size = 0x12000, scoped, tag = 'internal scratch']
  %s0 = inlined_call_operand.hbm [shape: f32[96,128], index: 0, kind: input, shape index: {}]
  %s1 = inlined_call_operand.hbm [shape: f32[128,128], index: 1, kind: input, shape index: {}]
  %s2 = inlined_call_operand.hbm [shape: f32[96,128], index: 2, kind: output, shape index: {}]
  %s3 = sld [smem:[#allocation0]]
  $region26: #{tpu_custom_call.1} parent=0
    _
  %s5 = ssub.s32 1, %s3
  %s6 = scalar_select 0, %s5, %s3
  $region1: #{tpu_custom_call.1} parent=0
    #allocation2 [shape = 'u8[49152]{0}', space=vmem, size = 0xc000, scoped, tag = 'input window, operand 0, single buffered']
    #allocation3 [shape = 's32[1]{0}', space=sflag, size = 0x4, scoped, tag = 'scoped memory for tpu_custom_call.1']
    #allocation4 [shape = 's32[1]{0}', space=sflag, size = 0x4, scoped, tag = 'scoped memory for tpu_custom_call.1']
    #allocation5 [shape = 'u8[65536]{0}', space=vmem, size = 0x10000, scoped, tag = 'input window, operand 1, single buffered']
    #allocation6 [shape = 's32[1]{0}', space=sflag, size = 0x4, scoped, tag = 'scoped memory for tpu_custom_call.1']
    #allocation7 [shape = 'u8[49152]{0}', space=vmem, size = 0xc000, scoped, tag = 'output window, operand 0, single buffered']
    %7 = vsyncpa [#allocation3], 0
    %8 = vsyncpa [#allocation6], 0
    %9 = vsyncpa [#allocation4], 0
    // Predicated region
    $region2: #{tpu_custom_call.1} parent=1 // pred_check
      _
    $region3: #{tpu_custom_call.1} parent=1 // pred_check_branch
      %11 = sbr.rel (0) target = $region5
    $region4: #{tpu_custom_call.1} parent=1 // pred_region
      %s13 = ssub.s32 1536, 1536
      %14 = vsyncadd [#allocation3], %s13
      %s15 = sshll.u32 [#allocation2], 4
      %s16 = int_to_ptr.vmem [resolvable:$true] %s15
      %21 = dma.hbm_to_vmem [thread:$0]  %s0, 1536, %s16, [#allocation3], 128, 128, 8
    $region5: #{tpu_custom_call.1} parent=1 // pred_fallthru
      _
    // Predicated region
    $region6: #{tpu_custom_call.1} parent=1 // pred_check
      _
    $region7: #{tpu_custom_call.1} parent=1 // pred_check_branch
      %23 = sbr.rel (0) target = $region9
    $region8: #{tpu_custom_call.1} parent=1 // pred_region
      %s25 = ssub.s32 2048, 2048
      %26 = vsyncadd [#allocation6], %s25
      %s27 = sshll.u32 [#allocation5], 4
      %s28 = int_to_ptr.vmem [resolvable:$true] %s27
      %33 = dma.hbm_to_vmem [thread:$0]  %s1, 2048, %s28, [#allocation6], 128, 128, 8
    $region9: #{tpu_custom_call.1} parent=1 // pred_fallthru
      _
    // Predicated region
    $region10: #{tpu_custom_call.1} parent=1 // pred_check
      _
    $region11: #{tpu_custom_call.1} parent=1 // pred_check_branch
      %35 = sbr.rel (0) target = $region13
    $region12: #{tpu_custom_call.1} parent=1 // pred_region
      %36 = dma.done [#allocation3], 1536
    $region13: #{tpu_custom_call.1} parent=1 // pred_fallthru
      _
    // Predicated region
    $region14: #{tpu_custom_call.1} parent=1 // pred_check
      _
    $region15: #{tpu_custom_call.1} parent=1 // pred_check_branch
      %38 = sbr.rel (0) target = $region17
    $region16: #{tpu_custom_call.1} parent=1 // pred_region
      %39 = dma.done [#allocation6], 2048
    $region17: #{tpu_custom_call.1} parent=1 // pred_fallthru
      _
    %v40 = vld [vmem:[#allocation2] sm:$0xff]
    %v41 = vld [vmem:[#allocation2 + $0x8] sm:$0xff]
    %v42 = vld [vmem:[#allocation2 + $0x10] sm:$0xff]
    %v43 = vld [vmem:[#allocation2 + $0x18] sm:$0xff]
    %v44 = vld [vmem:[#allocation2 + $0x20] sm:$0xff]
    %v45 = vld [vmem:[#allocation2 + $0x28] sm:$0xff]
    %v46 = vld [vmem:[#allocation2 + $0x30] sm:$0xff]
    %v47 = vld [vmem:[#allocation2 + $0x38] sm:$0xff]
    %v48 = vld [vmem:[#allocation2 + $0x40] sm:$0xff]
    %v49 = vld [vmem:[#allocation2 + $0x48] sm:$0xff]
    %v50 = vld [vmem:[#allocation2 + $0x50] sm:$0xff]
    %v51 = vld [vmem:[#allocation2 + $0x58] sm:$0xff]
    %v52 = vld [vmem:[#allocation5] sm:$0xff]
    %v53 = vld [vmem:[#allocation5 + $0x8] sm:$0xff]
    %v54 = vld [vmem:[#allocation5 + $0x10] sm:$0xff]
    %v55 = vld [vmem:[#allocation5 + $0x18] sm:$0xff]
    %v56 = vld [vmem:[#allocation5 + $0x20] sm:$0xff]
    %v57 = vld [vmem:[#allocation5 + $0x28] sm:$0xff]
    %v58 = vld [vmem:[#allocation5 + $0x30] sm:$0xff]
    %v59 = vld [vmem:[#allocation5 + $0x38] sm:$0xff]
    %v60 = vld [vmem:[#allocation5 + $0x40] sm:$0xff]
    %v61 = vld [vmem:[#allocation5 + $0x48] sm:$0xff]
    %v62 = vld [vmem:[#allocation5 + $0x50] sm:$0xff]
    %v63 = vld [vmem:[#allocation5 + $0x58] sm:$0xff]
    %v64 = vld [vmem:[#allocation5 + $0x60] sm:$0xff]
    %v65 = vld [vmem:[#allocation5 + $0x68] sm:$0xff]
    %v66 = vld [vmem:[#allocation5 + $0x70] sm:$0xff]
    %v67 = vld [vmem:[#allocation5 + $0x78] sm:$0xff]
    %68 = vmatprep.subr.mxu0 0.0
    %69 = vmatpush1.msra.mxu0 %v52
    %70 = vmatprep.subr.mxu0 0.0
    %71 = vmatpush1.msra.mxu0 %v53
    %72 = vmatprep.subr.mxu0 0.0
    %73 = vmatpush1.msra.mxu0 %v54
    %74 = vmatprep.subr.mxu0 0.0
    %75 = vmatpush1.msra.mxu0 %v55
    %76 = vmatprep.subr.mxu0 0.0
    %77 = vmatpush1.msra.mxu0 %v56
    %78 = vmatprep.subr.mxu0 0.0
    %79 = vmatpush1.msra.mxu0 %v57
    %80 = vmatprep.subr.mxu0 0.0
    %81 = vmatpush1.msra.mxu0 %v58
    %82 = vmatprep.subr.mxu0 0.0
    %83 = vmatpush1.msra.mxu0 %v59
    %84 = vmatprep.subr.mxu0 0.0
    %85 = vmatpush1.msra.mxu0 %v60
    %86 = vmatprep.subr.mxu0 0.0
    %87 = vmatpush1.msra.mxu0 %v61
    %88 = vmatprep.subr.mxu0 0.0
    %89 = vmatpush1.msra.mxu0 %v62
    %90 = vmatprep.subr.mxu0 0.0
    %91 = vmatpush1.msra.mxu0 %v63
    %92 = vmatprep.subr.mxu0 0.0
    %93 = vmatpush1.msra.mxu0 %v64
    %94 = vmatprep.subr.mxu0 0.0
    %95 = vmatpush1.msra.mxu0 %v65
    %96 = vmatprep.subr.mxu0 0.0
    %97 = vmatpush1.msra.mxu0 %v66
    %98 = vmatprep.subr.mxu0 0.0
    %99 = vmatpush1.msra.mxu0 %v67
    %100 = vmatprep.subr.mxu0 0.0
    %101 = vmatpush1.msra.mxu0 0.0
    %102 = vmatprep.subr.mxu0 0.0
    %103 = vmatpush1.msra.mxu0 0.0
    %104 = vmatprep.subr.mxu0 0.0
    %105 = vmatpush1.msra.mxu0 0.0
    %106 = vmatprep.subr.mxu0 0.0
    %107 = vmatpush1.msra.mxu0 0.0
    %108 = vmatprep.subr.mxu0 0.0
    %109 = vmatpush1.msra.mxu0 0.0
    %110 = vmatprep.subr.mxu0 0.0
    %111 = vmatpush1.msra.mxu0 0.0
    %112 = vmatprep.subr.mxu0 0.0
    %113 = vmatpush1.msra.mxu0 0.0
    %114 = vmatprep.subr.mxu0 0.0
    %115 = vmatpush1.msra.mxu0 0.0
    %116 = vmatprep.subr.mxu0 0.0
    %117 = vmatpush1.msra.mxu0 0.0
    %118 = vmatprep.subr.mxu0 0.0
    %119 = vmatpush1.msra.mxu0 0.0
    %120 = vmatprep.subr.mxu0 0.0
    %121 = vmatpush1.msra.mxu0 0.0
    %122 = vmatprep.subr.mxu0 0.0
    %123 = vmatpush1.msra.mxu0 0.0
    %124 = vmatprep.subr.mxu0 0.0
    %125 = vmatpush1.msra.mxu0 0.0
    %126 = vmatprep.subr.mxu0 0.0
    %127 = vmatpush1.msra.mxu0 0.0
    %128 = vmatprep.subr.mxu0 0.0
    %129 = vmatpush1.msra.mxu0 0.0
    %130 = vmatprep.subr.mxu0 0.0
    %131 = vmatpush1.msra.mxu0 0.0
    %132 = vmatprep.mubr.f32.mxu0 0.0
    %133 = vmatmul.mubr.f32.gmra.mrb[0].mxu0 %v40
    %v134 = vpop.f32.mrb[0].mxu0
    %v135 = vadd.f32 0.0, %v134
    %v136 = vpop.f32.mrb[0].mxu0
    %137 = vmatprep.mubr.f32.mxu0 0.0
    %138 = vmatmul.mubr.f32.gmra.mrb[0].mxu0 %v41
    %v139 = vpop.f32.mrb[0].mxu0
    %v140 = vadd.f32 0.0, %v139
    %v141 = vpop.f32.mrb[0].mxu0
    %142 = vmatprep.mubr.f32.mxu0 0.0
    %143 = vmatmul.mubr.f32.gmra.mrb[0].mxu0 %v42
    %v144 = vpop.f32.mrb[0].mxu0
    %v145 = vadd.f32 0.0, %v144
    %v146 = vpop.f32.mrb[0].mxu0
    %147 = vmatprep.mubr.f32.mxu0 0.0
    %148 = vmatmul.mubr.f32.gmra.mrb[0].mxu0 %v43
    %v149 = vpop.f32.mrb[0].mxu0
    %v150 = vadd.f32 0.0, %v149
    %v151 = vpop.f32.mrb[0].mxu0
    %152 = vmatprep.mubr.f32.mxu0 0.0
    %153 = vmatmul.mubr.f32.gmra.mrb[0].mxu0 %v44
    %v154 = vpop.f32.mrb[0].mxu0
    %v155 = vadd.f32 0.0, %v154
    %v156 = vpop.f32.mrb[0].mxu0
    %157 = vmatprep.mubr.f32.mxu0 0.0
    %158 = vmatmul.mubr.f32.gmra.mrb[0].mxu0 %v45
    %v159 = vpop.f32.mrb[0].mxu0
    %v160 = vadd.f32 0.0, %v159
    %v161 = vpop.f32.mrb[0].mxu0
    %162 = vmatprep.mubr.f32.mxu0 0.0
    %163 = vmatmul.mubr.f32.gmra.mrb[0].mxu0 %v46
    %v164 = vpop.f32.mrb[0].mxu0
    %v165 = vadd.f32 0.0, %v164
    %v166 = vpop.f32.mrb[0].mxu0
    %167 = vmatprep.mubr.f32.mxu0 0.0
    %168 = vmatmul.mubr.f32.gmra.mrb[0].mxu0 %v47
    %v169 = vpop.f32.mrb[0].mxu0
    %v170 = vadd.f32 0.0, %v169
    %v171 = vpop.f32.mrb[0].mxu0
    %172 = vmatprep.mubr.f32.mxu0 0.0
    %173 = vmatmul.mubr.f32.gmra.mrb[0].mxu0 %v48
    %v174 = vpop.f32.mrb[0].mxu0
    %v175 = vadd.f32 0.0, %v174
    %v176 = vpop.f32.mrb[0].mxu0
    %177 = vmatprep.mubr.f32.mxu0 0.0
    %178 = vmatmul.mubr.f32.gmra.mrb[0].mxu0 %v49
    %v179 = vpop.f32.mrb[0].mxu0
    %v180 = vadd.f32 0.0, %v179
    %v181 = vpop.f32.mrb[0].mxu0
    %182 = vmatprep.mubr.f32.mxu0 0.0
    %183 = vmatmul.mubr.f32.gmra.mrb[0].mxu0 %v50
    %v184 = vpop.f32.mrb[0].mxu0
    %v185 = vadd.f32 0.0, %v184
    %v186 = vpop.f32.mrb[0].mxu0
    %187 = vmatprep.mubr.f32.mxu0 0.0
    %188 = vmatmul.mubr.f32.gmra.mrb[0].mxu0 %v51
    %v189 = vpop.f32.mrb[0].mxu0
    %v190 = vadd.f32 0.0, %v189
    %v191 = vpop.f32.mrb[0].mxu0
    %192 = vdwg.mxu0
    %v193 = vand.u32 2147483647, %v135
    %v194 = vand.u32 2147483647, %v140
    %v195 = vand.u32 2147483647, %v145
    %v196 = vand.u32 2147483647, %v150
    %v197 = vand.u32 2147483647, %v155
    %v198 = vand.u32 2147483647, %v160
    %v199 = vand.u32 2147483647, %v165
    %v200 = vand.u32 2147483647, %v170
    %v201 = vand.u32 2147483647, %v175
    %v202 = vand.u32 2147483647, %v180
    %v203 = vand.u32 2147483647, %v185
    %v204 = vand.u32 2147483647, %v190
    %205 = vst [vmem:[#allocation7] sm:$0xff] %v193
    %206 = vst [vmem:[#allocation7 + $0x8] sm:$0xff] %v194
    %207 = vst [vmem:[#allocation7 + $0x10] sm:$0xff] %v195
    %208 = vst [vmem:[#allocation7 + $0x18] sm:$0xff] %v196
    %209 = vst [vmem:[#allocation7 + $0x20] sm:$0xff] %v197
    %210 = vst [vmem:[#allocation7 + $0x28] sm:$0xff] %v198
    %211 = vst [vmem:[#allocation7 + $0x30] sm:$0xff] %v199
    %212 = vst [vmem:[#allocation7 + $0x38] sm:$0xff] %v200
    %213 = vst [vmem:[#allocation7 + $0x40] sm:$0xff] %v201
    %214 = vst [vmem:[#allocation7 + $0x48] sm:$0xff] %v202
    %215 = vst [vmem:[#allocation7 + $0x50] sm:$0xff] %v203
    %216 = vst [vmem:[#allocation7 + $0x58] sm:$0xff] %v204
    // Predicated region
    $region18: #{tpu_custom_call.1} parent=1 // pred_check
      _
    $region19: #{tpu_custom_call.1} parent=1 // pred_check_branch
      %218 = sbr.rel (0) target = $region21
    $region20: #{tpu_custom_call.1} parent=1 // pred_region
      %s220 = ssub.s32 1536, 1536
      %221 = vsyncadd [#allocation4], %s220
      %s222 = sshll.u32 [#allocation7], 4
      %s223 = int_to_ptr.vmem [resolvable:$true] %s222
      %228 = dma.vmem_to_hbm [thread:$0]  %s223, 1536, %s2, [#allocation4], 128, 128, 8
    $region21: #{tpu_custom_call.1} parent=1 // pred_fallthru
      _
    // Predicated region
    $region22: #{tpu_custom_call.1} parent=1 // pred_check
      _
    $region23: #{tpu_custom_call.1} parent=1 // pred_check_branch
      %230 = sbr.rel (0) target = $region25
    $region24: #{tpu_custom_call.1} parent=1 // pred_region
      %231 = dma.done [#allocation4], 1536
    $region25: #{tpu_custom_call.1} parent=1 // pred_fallthru
      _
    %232 = vsyncpa [#allocation3], 1
    %233 = vsyncpa [#allocation6], 1
    %234 = vsyncpa [#allocation4], 1

</llo_original>
